<compile_context>
chip_gen: v7x
topology: tpu7x:2x2x1
jax: 0.10.0
libtpu: 0.0.40
codegen_flags: <defaults>
</compile_context>

<pallas_src>
import math
import numpy as np

import jax
import jax.numpy as jnp
from jax import lax
from jax.experimental import pallas as pl
from jax.experimental.pallas import tpu as pltpu


N_HEADS = 4
LANE_PAD = 128          # lane-padded channel width (true hidden = 32)


# ----------------------------------------------------------------------------
# helpers
# ----------------------------------------------------------------------------
def _round_up(x, m):
    return ((x + m - 1) // m) * m


def _full_spec(shape):
    nd = len(shape)
    return pl.BlockSpec(tuple(shape), lambda i, _nd=nd: (0,) * _nd)


def _pick_tm(n8):
    tm = min(512, n8)                          # big row tile: the MLP is HBM-bound
    if n8 // tm < 2 and n8 >= 16:              # keep >=2 grid steps for v7x's 2 TCs
        tm = max(8, _round_up((n8 + 1) // 2, 8))
    return tm


def _pick_tr(r8, nmax, cp):
    # per-reaction f32 working set: 2x input buffers + broadcast attention temps + slabs
    per_r = (2 * nmax * cp + 2 * nmax * nmax * cp + 14 * nmax * cp) * 4
    budget = 20 * 1024 * 1024
    tr = max(8, min(128, (budget // per_r) // 8 * 8))
    tr = min(tr, r8)
    if r8 // tr < 2 and r8 >= 16:              # keep >=2 grid steps for v7x megacore
        tr = min(tr, max(8, _round_up((r8 + 1) // 2, 8)))
    return tr


# ----------------------------------------------------------------------------
# Kernel 1: gene MLP  (Linear -> LayerNorm -> ReLU -> Dropout(eval)) x 2
# ----------------------------------------------------------------------------
def gene_mlp(x, p, hidden_true):
    n, cin = x.shape
    hp = p["w1"].shape[1]
    n8 = _round_up(max(n, 8), 8)
    tm = _pick_tm(n8)
    n_pad = _round_up(n8, tm)
    if n_pad != n:
        x = jnp.pad(x, ((0, n_pad - n), (0, 0)))
    inv_h = 1.0 / float(hidden_true)

    def kernel(x_ref, w1_ref, w2_ref, vec_ref, o_ref):
        lane = lax.broadcasted_iota(jnp.int32, (1, hp), 1)
        cmask = (lane < hidden_true).astype(jnp.float32)

        def mln(t, g, b):                      # LayerNorm masked to the true channels
            mu = jnp.sum(t, axis=-1, keepdims=True) * inv_h
            d = (t - mu) * cmask
            var = jnp.sum(d * d, axis=-1, keepdims=True) * inv_h
            return d * lax.rsqrt(var + 1e-5) * g + b

        vec = vec_ref[...]                     # (6, hp): b1, g1, be1, b2, g2, be2
        h = jnp.dot(x_ref[...].astype(jnp.bfloat16), w1_ref[...],
                    preferred_element_type=jnp.float32) + vec[0:1]
        h = jnp.maximum(mln(h, vec[1:2], vec[2:3]), 0.0)   # ReLU; Dropout(eval)=identity
        h = jnp.dot(h.astype(jnp.bfloat16), w2_ref[...],
                    preferred_element_type=jnp.float32) + vec[3:4]
        h = jnp.maximum(mln(h, vec[4:5], vec[5:6]), 0.0)
        o_ref[...] = h

    out = pl.pallas_call(
        kernel,
        out_shape=jax.ShapeDtypeStruct((n_pad, hp), jnp.float32),
        grid=(n_pad // tm,),
        in_specs=[pl.BlockSpec((tm, cin), lambda i: (i, 0)),
                  _full_spec(p["w1"].shape), _full_spec(p["w2"].shape),
                  _full_spec(p["vec"].shape)],
        out_specs=pl.BlockSpec((tm, hp), lambda i: (i, 0)),
        compiler_params=pltpu.CompilerParams(dimension_semantics=("parallel",)),
    )(x, p["w1"], p["w2"], p["vec"])
    return out[:n]                             # (n, hp) lane-padded


# ----------------------------------------------------------------------------
# Kernel 2: SetTransformerAggregation  (2 encoder SABs -> PMA -> decoder SAB)
# ----------------------------------------------------------------------------
def set_transformer_agg(x_dense, mask, p, hidden_true):
    R, nmax, cp = x_dense.shape
    dh = hidden_true // N_HEADS
    scale = 1.0 / math.sqrt(dh)                # torch MultiheadAttention: 1/sqrt(d_head)

    r8 = _round_up(max(R, 8), 8)
    tr = _pick_tr(r8, nmax, cp)
    r_pad = _round_up(r8, tr)
    if r_pad != R:
        x_dense = jnp.pad(x_dense, ((0, r_pad - R), (0, 0), (0, 0)))
        mask = jnp.pad(mask, ((0, r_pad - R), (0, 0)))

    def kernel(x_ref, m_ref, wqkv_ref, bqkv_ref, wo_ref, bo_ref, wff_ref, bff_ref,
               lng_ref, lnb_ref, wpma_ref, bpma_ref, seed_ref, o_ref):
        TR = x_ref.shape[0]
        Wqkv = wqkv_ref[...]; Bqkv = bqkv_ref[...]
        Wo = wo_ref[...];     Bo = bo_ref[...]
        Wff = wff_ref[...];   Bff = bff_ref[...]
        LG = lng_ref[...];    LB = lnb_ref[...]

        lane = lax.broadcasted_iota(jnp.int32, (1, cp), 1)
        cmask = (lane < hidden_true).astype(jnp.float32)
        head_masks = [((lane >= h * dh) & (lane < (h + 1) * dh)).astype(jnp.float32)
                      for h in range(N_HEADS)]
        inv_c = 1.0 / float(hidden_true)

        x = x_ref[...].astype(jnp.float32)                 # (TR, nmax, cp); pad lanes 0
        m = m_ref[...].astype(jnp.float32)                 # (TR, nmax)  1 = valid key
        key_bias = (m - 1.0) * 1e9                         # additive key-padding mask

        def mln(t, g, b):                                  # masked LayerNorm
            mu = jnp.sum(t, axis=-1, keepdims=True) * inv_c
            d = (t - mu) * cmask
            var = jnp.sum(d * d, axis=-1, keepdims=True) * inv_c
            return d * lax.rsqrt(var + 1e-5) * g + b

        def mha(Q, K, V, bias):
            # VPU multi-head attention: heads are disjoint lane masks -> no 8-lane
            # slices / concat, no per-reaction batched MXU micro-matmuls.
            nq, nk = Q.shape[1], K.shape[1]
            if nk == 1:                                    # softmax over one key == 1
                return jnp.broadcast_to(V, (TR, nq, cp))
            Qb = Q[:, :, None, :]                          # (TR, nq, 1, cp)
            b3 = bias[:, None, :]                          # (TR, 1, nk)
            out = jnp.zeros((TR, nq, cp), jnp.float32)
            for hm in head_masks:                          # static 4-iteration loop
                Kh = (K * hm)[:, None, :, :]               # (TR, 1, nk, cp)
                s = jnp.sum(Qb * Kh, axis=-1) * scale + b3 # (TR, nq, nk)
                s = s - jnp.max(s, axis=-1, keepdims=True)
                e = jnp.exp(s)
                a = e / jnp.sum(e, axis=-1, keepdims=True) # exact softmax
                Vh = (V * hm)[:, None, :, :]               # (TR, 1, nk, cp)
                out = out + jnp.sum(a[:, :, :, None] * Vh, axis=2)
            return out

        def mab(q_in, kv_in, layer, bias, self_attn):
            # PyG MultiheadAttentionBlock: h = LN1(q_in + MHA(q_in, kv, kv))  [with W_O]
            #                              out = LN2(h + relu(Lin(h)))
            nq, nk = q_in.shape[1], kv_in.shape[1]
            q2 = q_in.reshape(TR * nq, cp).astype(jnp.bfloat16)
            if self_attn:
                qkv = jnp.dot(q2, Wqkv[layer],
                              preferred_element_type=jnp.float32) + Bqkv[layer]
                Q = qkv[:, :cp].reshape(TR, nq, cp)        # 128-aligned lane splits: free
                K = qkv[:, cp:2 * cp].reshape(TR, nk, cp)
                V = qkv[:, 2 * cp:].reshape(TR, nk, cp)
            else:
                Q = (jnp.dot(q2, Wqkv[layer, :, :cp],
                             preferred_element_type=jnp.float32)
                     + Bqkv[layer][:, :cp]).reshape(TR, nq, cp)
                k2 = kv_in.reshape(TR * nk, cp).astype(jnp.bfloat16)
                kv = jnp.dot(k2, Wqkv[layer, :, cp:],
                             preferred_element_type=jnp.float32) + Bqkv[layer][:, cp:]
                K = kv[:, :cp].reshape(TR, nk, cp)
                V = kv[:, cp:].reshape(TR, nk, cp)
            attn = mha(Q, K, V, bias)
            attn = (jnp.dot(attn.reshape(TR * nq, cp).astype(jnp.bfloat16), Wo[layer],
                            preferred_element_type=jnp.float32)
                    + Bo[layer]).reshape(TR, nq, cp)       # output projection W_O
            h1 = mln(q_in + attn, LG[layer, 0], LB[layer, 0])   # residual on raw q_in
            ff = jnp.dot(h1.reshape(TR * nq, cp).astype(jnp.bfloat16), Wff[layer],
                         preferred_element_type=jnp.float32) + Bff[layer]
            return mln(h1 + jnp.maximum(ff, 0.0).reshape(TR, nq, cp),
                       LG[layer, 1], LB[layer, 1])

        h = mab(x, x, 0, key_bias, True)                   # encoder SAB 1
        h = mab(h, h, 1, key_bias, True)                   # encoder SAB 2
        # PMA: x <- relu(Lin(x)); MAB(seed, x) with key-padding mask
        hpma = jnp.maximum(
            jnp.dot(h.reshape(TR * nmax, cp).astype(jnp.bfloat16), wpma_ref[...],
                    preferred_element_type=jnp.float32) + bpma_ref[...], 0.0
        ).reshape(TR, nmax, cp)
        seed = jnp.broadcast_to(seed_ref[...][None], (TR, 1, cp))
        pooled = mab(seed, hpma, 2, key_bias, False)
        dec = mab(pooled, pooled, 3, jnp.zeros((TR, 1), jnp.float32), True)  # decoder SAB
        # nan_to_num equivalent: empty / fully padded reactions -> exact zeros
        valid = (jnp.sum(m, axis=-1, keepdims=True) > 0.0).astype(jnp.float32)
        o_ref[...] = dec[:, 0, :] * valid

    out = pl.pallas_call(
        kernel,
        out_shape=jax.ShapeDtypeStruct((r_pad, cp), jnp.float32),
        grid=(r_pad // tr,),
        in_specs=[
            pl.BlockSpec((tr, nmax, cp), lambda r: (r, 0, 0)),
            pl.BlockSpec((tr, nmax), lambda r: (r, 0)),
            _full_spec(p["Wqkv"].shape), _full_spec(p["Bqkv"].shape),
            _full_spec(p["Wo"].shape), _full_spec(p["Bo"].shape),
            _full_spec(p["Wff"].shape), _full_spec(p["Bff"].shape),
            _full_spec(p["LG"].shape), _full_spec(p["LB"].shape),
            _full_spec(p["Wpma"].shape), _full_spec(p["Bpma"].shape),
            _full_spec(p["seed"].shape),
        ],
        out_specs=pl.BlockSpec((tr, cp), lambda r: (r, 0)),
        compiler_params=pltpu.CompilerParams(
            dimension_semantics=("parallel",),
            # 48 MiB scoped VMEM: generous on v5e/v6e (128 MiB physical), still leaves
            # headroom under v7x's 64 MiB physical; tr is budgeted against ~20 MiB.
            vmem_limit_bytes=48 * 1024 * 1024,
        ),
    )(x_dense, mask, p["Wqkv"], p["Bqkv"], p["Wo"], p["Bo"], p["Wff"], p["Bff"],
      p["LG"], p["LB"], p["Wpma"], p["Bpma"], p["seed"])
    return out[:R]


# ----------------------------------------------------------------------------
# Parameter init (deterministic, synthetic; lane-padded to LANE_PAD)
# ----------------------------------------------------------------------------
def init_params(key, in_channels, hidden, hp=LANE_PAD):
    ks = list(jax.random.split(key, 24))
    kit = iter(ks)

    def lin(fi, fo):
        k1, k2 = jax.random.split(next(kit))
        bound = 1.0 / math.sqrt(fi)
        w = jax.random.uniform(k1, (fi, fo), jnp.float32, -bound, bound)
        b = jax.random.uniform(k2, (1, fo), jnp.float32, -bound, bound)
        return w, b

    def padc(a):
        return jnp.pad(a, ((0, 0), (0, hp - a.shape[1])))

    def padrc(a):
        return jnp.pad(a, ((0, hp - a.shape[0]), (0, hp - a.shape[1])))

    gam = padc(jnp.ones((1, hidden), jnp.float32))      # LN gamma: 1 on true lanes, 0 pad
    bet = jnp.zeros((1, hp), jnp.float32)               # LN beta

    # gene MLP: (Linear -> LayerNorm -> ReLU -> Dropout) x 2
    w1, b1 = lin(in_channels, hidden)
    w2, b2 = lin(hidden, hidden)
    mlp = dict(
        w1=padc(w1).astype(jnp.bfloat16),               # (cin, hp)
        w2=padrc(w2).astype(jnp.bfloat16),              # (hp, hp)
        vec=jnp.concatenate([padc(b1), gam, bet, padc(b2), gam, bet], axis=0),  # (6, hp)
    )

    # SetTransformerAggregation: 4 MAB layers (enc SAB x2, PMA's MAB, dec SAB)
    Wqkv, Bqkv, Wo, Bo, Wff, Bff = [], [], [], [], [], []
    for _ in range(4):
        wq, bq = lin(hidden, hidden)
        wk, bk = lin(hidden, hidden)
        wv, bv = lin(hidden, hidden)
        wo, bo = lin(hidden, hidden)
        wf, bf = lin(hidden, hidden)
        Wqkv.append(jnp.concatenate([padrc(wq), padrc(wk), padrc(wv)], axis=1))
        Bqkv.append(jnp.concatenate([padc(bq), padc(bk), padc(bv)], axis=1))
        Wo.append(padrc(wo)); Bo.append(padc(bo))
        Wff.append(padrc(wf)); Bff.append(padc(bf))
    wp, bp = lin(hidden, hidden)                        # PMA pre-linear
    seed = padc(jax.random.normal(next(kit), (1, hidden), jnp.float32)
                / math.sqrt(hidden))
    sab = dict(
        Wqkv=jnp.stack(Wqkv).astype(jnp.bfloat16),      # (4, hp, 3hp)
        Bqkv=jnp.stack(Bqkv),                           # (4, 1, 3hp)
        Wo=jnp.stack(Wo).astype(jnp.bfloat16),          # (4, hp, hp)
        Bo=jnp.stack(Bo),                               # (4, 1, hp)
        Wff=jnp.stack(Wff).astype(jnp.bfloat16),        # (4, hp, hp)
        Bff=jnp.stack(Bff),                             # (4, 1, hp)
        LG=jnp.broadcast_to(gam, (4, 2, 1, hp)),
        LB=jnp.zeros((4, 2, 1, hp), jnp.float32),
        Wpma=padrc(wp).astype(jnp.bfloat16),            # (hp, hp)
        Bpma=padc(bp),                                  # (1, hp)
        seed=seed,                                      # (1, hp)
    )
    return dict(mlp=mlp, sab=sab, hidden=hidden)


# ----------------------------------------------------------------------------
# Full forward:  (gene_features, reaction_to_genes) -> (H_g, H_r)
# ----------------------------------------------------------------------------
def gene_context_processor(gene_features, reaction_to_genes, params):
    hidden = params["hidden"]
    hg_pad = gene_mlp(gene_features, params["mlp"], hidden)      # (n, hp) lane-padded
    h_g = hg_pad[:, :hidden]

    if len(reaction_to_genes) == 0:
        return h_g, jnp.zeros((0, hidden), jnp.float32)

    R = max(reaction_to_genes.keys()) + 1
    nmax = max((len(v) for v in reaction_to_genes.values()), default=0)
    if nmax == 0:
        return h_g, jnp.zeros((R, hidden), jnp.float32)
    nmax = max(8, _round_up(nmax, 8))

    idx = np.zeros((R, nmax), dtype=np.int32)
    msk = np.zeros((R, nmax), dtype=np.float32)
    for r, genes in reaction_to_genes.items():
        for j, g in enumerate(genes):
            idx[r, j] = g
            msk[r, j] = 1.0

    # TODO(synk): the H_g -> per-reaction gather (to_dense_batch equivalent) stays an
    # XLA jnp.take; a fused in-kernel DMA gather of 512-byte rows is not worth it here.
    x_dense = jnp.take(hg_pad, jnp.asarray(idx), axis=0)         # (R, nmax, hp)
    hr_pad = set_transformer_agg(x_dense, jnp.asarray(msk), params["sab"], hidden)
    return h_g, hr_pad[:, :hidden]


# ----------------------------------------------------------------------------
if __name__ == "__main__":
    in_channels = 16
    hidden = 32
    n_genes = 16

    key = jax.random.PRNGKey(0)
    k_feat, k_par = jax.random.split(key)
    gene_features = jax.random.normal(k_feat, (n_genes, in_channels), jnp.float32)

    reaction_to_genes = {
        0: [0, 1, 2],
        1: [3, 4, 5, 6],
        2: [7, 8],
        3: [9, 10, 11, 12, 13],
        4: [14, 15],
    }

    params = init_params(k_par, in_channels, hidden)

    H_g, H_r = gene_context_processor(gene_features, reaction_to_genes, params)
    H_g = jax.block_until_ready(H_g)
    H_r = jax.block_until_ready(H_r)

    assert H_g.shape == (n_genes, hidden)
    assert H_r.shape == (len(reaction_to_genes), hidden)
    assert bool(jnp.all(jnp.isfinite(H_g))) and bool(jnp.all(jnp.isfinite(H_r)))
    print("KERNEL_OK")
</pallas_src>

<mosaic_0001>
module attributes {stable_mosaic.version = 11 : i64} {
  func.func @kernel(%arg0: i32, %arg1: memref<8x16xf32, #tpu.memory_space<vmem>>, %arg2: memref<16x128xbf16, #tpu.memory_space<vmem>>, %arg3: memref<128x128xbf16, #tpu.memory_space<vmem>>, %arg4: memref<6x128xf32, #tpu.memory_space<vmem>>, %arg5: memref<8x128xf32, #tpu.memory_space<vmem>>) attributes {dimension_semantics = [#tpu.dimension_semantics<parallel>], iteration_bounds = array<i64: 2>, scalar_prefetch = 0 : i64, scratch_operands = 0 : i64, tpu.core_type = #tpu.core_type<tc>, window_params = [{transform_indices = @transform_0, window_bounds = array<i64: 8, 16>}, {pipeline_mode = #tpu.pipeline_mode<synchronous>, transform_indices = @transform_1, window_bounds = array<i64: 16, 128>}, {pipeline_mode = #tpu.pipeline_mode<synchronous>, transform_indices = @transform_2, window_bounds = array<i64: 128, 128>}, {pipeline_mode = #tpu.pipeline_mode<synchronous>, transform_indices = @transform_3, window_bounds = array<i64: 6, 128>}, {transform_indices = @transform_4, window_bounds = array<i64: 8, 128>}]} {
    %0 = tpu.iota {dimensions = array<i32: 1>} : vector<1x128xi32>
    %c32_i32 = arith.constant 32 : i32
    %1 = vector.broadcast %c32_i32 : i32 to vector<1x128xi32>
    %2 = arith.cmpi slt, %0, %1 : vector<1x128xi32>
    %3 = arith.extui %2 : vector<1x128xi1> to vector<1x128xi32>
    %4 = arith.sitofp %3 : vector<1x128xi32> to vector<1x128xf32>
    %c0 = arith.constant 0 : index
    %c0_0 = arith.constant 0 : index
    %5 = vector.load %arg4[%c0, %c0_0] : memref<6x128xf32, #tpu.memory_space<vmem>>, vector<6x128xf32>
    %c0_1 = arith.constant 0 : index
    %c0_2 = arith.constant 0 : index
    %6 = vector.load %arg1[%c0_1, %c0_2] : memref<8x16xf32, #tpu.memory_space<vmem>>, vector<8x16xf32>
    %7 = arith.truncf %6 : vector<8x16xf32> to vector<8x16xbf16>
    %c0_3 = arith.constant 0 : index
    %c0_4 = arith.constant 0 : index
    %8 = vector.load %arg2[%c0_3, %c0_4] : memref<16x128xbf16, #tpu.memory_space<vmem>>, vector<16x128xbf16>
    %cst = arith.constant dense<0.000000e+00> : vector<8x128xf32>
    %9 = tpu.matmul %7, %8, %cst {dimension_numbers = #tpu.dot_dimension_numbers<[1], [0], [0], [1], [0, 0, 1, 1], [], []>} : vector<8x16xbf16>, vector<16x128xbf16>, vector<8x128xf32> -> vector<8x128xf32>
    %10 = vector.extract_strided_slice %5 {offsets = [0, 0], sizes = [1, 128], strides = [1, 1]} : vector<6x128xf32> to vector<1x128xf32>
    %11 = vector.broadcast %10 : vector<1x128xf32> to vector<8x128xf32>
    %12 = arith.addf %9, %11 : vector<8x128xf32>
    %13 = vector.extract_strided_slice %5 {offsets = [1, 0], sizes = [1, 128], strides = [1, 1]} : vector<6x128xf32> to vector<1x128xf32>
    %14 = vector.extract_strided_slice %5 {offsets = [2, 0], sizes = [1, 128], strides = [1, 1]} : vector<6x128xf32> to vector<1x128xf32>
    %cst_5 = arith.constant dense<0.000000e+00> : vector<8xf32>
    %15 = vector.multi_reduction <add>, %12, %cst_5 [1] : vector<8x128xf32> to vector<8xf32>
    %16 = vector.shape_cast %15 : vector<8xf32> to vector<8x1xf32>
    %cst_6 = arith.constant 3.125000e-02 : f32
    %17 = vector.broadcast %cst_6 : f32 to vector<8x1xf32>
    %18 = arith.mulf %16, %17 : vector<8x1xf32>
    %19 = vector.broadcast %18 : vector<8x1xf32> to vector<8x128xf32>
    %20 = arith.subf %12, %19 : vector<8x128xf32>
    %21 = vector.broadcast %4 : vector<1x128xf32> to vector<8x128xf32>
    %22 = arith.mulf %20, %21 : vector<8x128xf32>
    %23 = arith.mulf %22, %22 : vector<8x128xf32>
    %cst_7 = arith.constant dense<0.000000e+00> : vector<8xf32>
    %24 = vector.multi_reduction <add>, %23, %cst_7 [1] : vector<8x128xf32> to vector<8xf32>
    %25 = vector.shape_cast %24 : vector<8xf32> to vector<8x1xf32>
    %cst_8 = arith.constant 3.125000e-02 : f32
    %26 = vector.broadcast %cst_8 : f32 to vector<8x1xf32>
    %27 = arith.mulf %25, %26 : vector<8x1xf32>
    %cst_9 = arith.constant 9.99999974E-6 : f32
    %28 = vector.broadcast %cst_9 : f32 to vector<8x1xf32>
    %29 = arith.addf %27, %28 : vector<8x1xf32>
    %30 = math.rsqrt %29 : vector<8x1xf32>
    %31 = vector.broadcast %30 : vector<8x1xf32> to vector<8x128xf32>
    %32 = arith.mulf %22, %31 : vector<8x128xf32>
    %33 = vector.broadcast %13 : vector<1x128xf32> to vector<8x128xf32>
    %34 = arith.mulf %32, %33 : vector<8x128xf32>
    %35 = vector.broadcast %14 : vector<1x128xf32> to vector<8x128xf32>
    %36 = arith.addf %34, %35 : vector<8x128xf32>
    %cst_10 = arith.constant 0.000000e+00 : f32
    %37 = vector.broadcast %cst_10 : f32 to vector<8x128xf32>
    %38 = arith.maximumf %36, %37 : vector<8x128xf32>
    %39 = arith.truncf %38 : vector<8x128xf32> to vector<8x128xbf16>
    %c0_11 = arith.constant 0 : index
    %c0_12 = arith.constant 0 : index
    %40 = vector.load %arg3[%c0_11, %c0_12] : memref<128x128xbf16, #tpu.memory_space<vmem>>, vector<128x128xbf16>
    %cst_13 = arith.constant dense<0.000000e+00> : vector<8x128xf32>
    %41 = tpu.matmul %39, %40, %cst_13 {dimension_numbers = #tpu.dot_dimension_numbers<[1], [0], [0], [1], [0, 0, 1, 1], [], []>} : vector<8x128xbf16>, vector<128x128xbf16>, vector<8x128xf32> -> vector<8x128xf32>
    %42 = vector.extract_strided_slice %5 {offsets = [3, 0], sizes = [1, 128], strides = [1, 1]} : vector<6x128xf32> to vector<1x128xf32>
    %43 = vector.broadcast %42 : vector<1x128xf32> to vector<8x128xf32>
    %44 = arith.addf %41, %43 : vector<8x128xf32>
    %45 = vector.extract_strided_slice %5 {offsets = [4, 0], sizes = [1, 128], strides = [1, 1]} : vector<6x128xf32> to vector<1x128xf32>
    %46 = vector.extract_strided_slice %5 {offsets = [5, 0], sizes = [1, 128], strides = [1, 1]} : vector<6x128xf32> to vector<1x128xf32>
    %cst_14 = arith.constant dense<0.000000e+00> : vector<8xf32>
    %47 = vector.multi_reduction <add>, %44, %cst_14 [1] : vector<8x128xf32> to vector<8xf32>
    %48 = vector.shape_cast %47 : vector<8xf32> to vector<8x1xf32>
    %cst_15 = arith.constant 3.125000e-02 : f32
    %49 = vector.broadcast %cst_15 : f32 to vector<8x1xf32>
    %50 = arith.mulf %48, %49 : vector<8x1xf32>
    %51 = vector.broadcast %50 : vector<8x1xf32> to vector<8x128xf32>
    %52 = arith.subf %44, %51 : vector<8x128xf32>
    %53 = vector.broadcast %4 : vector<1x128xf32> to vector<8x128xf32>
    %54 = arith.mulf %52, %53 : vector<8x128xf32>
    %55 = arith.mulf %54, %54 : vector<8x128xf32>
    %cst_16 = arith.constant dense<0.000000e+00> : vector<8xf32>
    %56 = vector.multi_reduction <add>, %55, %cst_16 [1] : vector<8x128xf32> to vector<8xf32>
    %57 = vector.shape_cast %56 : vector<8xf32> to vector<8x1xf32>
    %cst_17 = arith.constant 3.125000e-02 : f32
    %58 = vector.broadcast %cst_17 : f32 to vector<8x1xf32>
    %59 = arith.mulf %57, %58 : vector<8x1xf32>
    %cst_18 = arith.constant 9.99999974E-6 : f32
    %60 = vector.broadcast %cst_18 : f32 to vector<8x1xf32>
    %61 = arith.addf %59, %60 : vector<8x1xf32>
    %62 = math.rsqrt %61 : vector<8x1xf32>
    %63 = vector.broadcast %62 : vector<8x1xf32> to vector<8x128xf32>
    %64 = arith.mulf %54, %63 : vector<8x128xf32>
    %65 = vector.broadcast %45 : vector<1x128xf32> to vector<8x128xf32>
    %66 = arith.mulf %64, %65 : vector<8x128xf32>
    %67 = vector.broadcast %46 : vector<1x128xf32> to vector<8x128xf32>
    %68 = arith.addf %66, %67 : vector<8x128xf32>
    %cst_19 = arith.constant 0.000000e+00 : f32
    %69 = vector.broadcast %cst_19 : f32 to vector<8x128xf32>
    %70 = arith.maximumf %68, %69 : vector<8x128xf32>
    %c0_20 = arith.constant 0 : index
    %c0_21 = arith.constant 0 : index
    %71 = vector.load %arg5[%c0_20, %c0_21] : memref<8x128xf32, #tpu.memory_space<vmem>>, vector<8x128xf32>
    tpu.vector_store %arg5[%c0_20, %c0_21], %70 {strides = array<i32>} : memref<8x128xf32, #tpu.memory_space<vmem>>, vector<8x128xf32>,
    return
  }
  func.func @transform_0(%arg0: i32) -> (i32, i32) {
    %c0_i32 = arith.constant 0 : i32
    %c0_i32_0 = arith.constant 0 : i32
    return %arg0, %c0_i32 : i32, i32
  }
  func.func @transform_1(%arg0: i32) -> (i32, i32) {
    %c0_i32 = arith.constant 0 : i32
    %c0_i32_0 = arith.constant 0 : i32
    %c0_i32_1 = arith.constant 0 : i32
    return %c0_i32, %c0_i32_0 : i32, i32
  }
  func.func @transform_2(%arg0: i32) -> (i32, i32) {
    %c0_i32 = arith.constant 0 : i32
    %c0_i32_0 = arith.constant 0 : i32
    %c0_i32_1 = arith.constant 0 : i32
    return %c0_i32, %c0_i32_0 : i32, i32
  }
  func.func @transform_3(%arg0: i32) -> (i32, i32) {
    %c0_i32 = arith.constant 0 : i32
    %c0_i32_0 = arith.constant 0 : i32
    %c0_i32_1 = arith.constant 0 : i32
    return %c0_i32, %c0_i32_0 : i32, i32
  }
  func.func @transform_4(%arg0: i32) -> (i32, i32) {
    %c0_i32 = arith.constant 0 : i32
    %c0_i32_0 = arith.constant 0 : i32
    return %arg0, %c0_i32 : i32, i32
  }
}

</mosaic_0001>

<llo_original>
// kernel: tpu_custom_call.1
$region0: #{tpu_custom_call.1}
  #allocation0 [shape = 'u32[]', space=smem, size = 0x4, offset = 0x4, fixed_abs, tag = 'smem constant byte address 0x4 - core index']
  #allocation1 [shape = 'u32[144,128]{1,0:T(1,128)}', space=vmem, size = 0x12000, scoped, tag = 'internal scratch']
  %s0 = inlined_call_operand.hbm [shape: f32[16,16], index: 0, kind: input, shape index: {}]
  %s1 = inlined_call_operand.hbm [shape: bf16[16,128], index: 1, kind: input, shape index: {}]
  %s2 = inlined_call_operand.hbm [shape: bf16[128,128], index: 2, kind: input, shape index: {}]
  %s3 = inlined_call_operand.vmem [shape: f32[6,128], index: 3, kind: input, shape index: {}]
  %s4 = inlined_call_operand.hbm [shape: f32[16,128], index: 4, kind: output, shape index: {}]
  %s5 = sld [smem:[#allocation0]]
  $region61: #{tpu_custom_call.1} parent=0
    _
  %s7 = ssub.s32 1, %s5
  %s8 = scalar_select 0, %s7, %s5
  $region1: #{tpu_custom_call.1} parent=0
    #allocation2 [shape = 'u8[8192]{0}', space=vmem, size = 0x2000, scoped, tag = 'input window, operand 0']
    #allocation3 [shape = 's32[2]{0}', space=sflag, size = 0x8, scoped, tag = 'scoped memory for tpu_custom_call.1']
    #allocation4 [shape = 's32[2]{0}', space=sflag, size = 0x8, scoped, tag = 'scoped memory for tpu_custom_call.1']
    #allocation5 [shape = 'u8[4096]{0}', space=vmem, size = 0x1000, scoped, tag = 'input window, operand 1, single buffered']
    #allocation6 [shape = 's32[1]{0}', space=sflag, size = 0x4, scoped, tag = 'scoped memory for tpu_custom_call.1']
    #allocation7 [shape = 'u8[32768]{0}', space=vmem, size = 0x8000, scoped, tag = 'input window, operand 2, single buffered']
    #allocation8 [shape = 'u8[8192]{0}', space=vmem, size = 0x2000, scoped, tag = 'output window, operand 0']
    %9 = vsyncpa [#allocation3], 0
    %s10 = scalar_lea.sflag [#allocation3], 1
    %11 = vsyncpa %s10, 0
    %12 = vsyncpa [#allocation6], 0
    %13 = vsyncpa [#allocation4], 0
    %s14 = scalar_lea.sflag [#allocation4], 1
    %15 = vsyncpa %s14, 0
    loop: start=0, step=1, limit=4
    $region2: #{tpu_custom_call.1} parent=1 // loop_pre_header
      _
    $region3: #{tpu_custom_call.1} parent=1 // loop_header
      %s17 = sphi 0, %s21
      %p18 = scmp.ge.s32.totalorder %s17, 4
      %s27 = sphi 0, %s29
      %s30 = sphi 0, %s27
      %s31 = sphi 0, %s30
      %s47 = sphi 0, %s31
      %s51 = sphi 0, %s51
      %s53 = sphi 0, %s51
      %s54 = sphi 0, %s53
      %s68 = sphi 0, %s54
      %s72 = sphi 0, %s72
      %s74 = sphi 0, %s72
      %s75 = sphi 0, %s74
      %s89 = sphi 0, %s75
      %s93 = sphi 0, %s93
      %s95 = sphi 0, %s93
      %s96 = sphi 0, %s95
      %s110 = sphi 0, %s96
      %s116 = sphi 0, %s118
      %s119 = sphi 0, %s116
      %s120 = sphi 0, %s119
      %s136 = sphi 0, %s120
    $region4: #{tpu_custom_call.1} parent=1 // loop_header_branch
      %20 = sbr.rel (%p18) target = $region8
    $region5: #{tpu_custom_call.1} parent=1 // loop_body
      %s22 = ssub.s32 %s17, 1
      %s23 = ssub.s32 %s17, 2
      %s24 = sadd.s32 %s17, 1
      %s25 = ssub.s32 %s17, %s24
      %p26 = scmp.eq.s32.totalorder %s25, 0
      %s28 = sadd.s32 %s27, 1
      %s29 = scalar_select %p26, %s27, %s28
      %p32 = pneg %p26
      %p33 = scmp.eq.s32.totalorder %s17, 1
      %p34 = por %p32, %p33
      %p35 = scmp.ne.s32.totalorder %s27, %s30
      %p36 = scmp.eq.s32.totalorder %s17, 0
      %p37 = por %p35, %p36
      %p38 = scmp.ne.s32.totalorder %s27, %s30
      %p39 = scmp.eq.s32.totalorder %s22, 1
      %p40 = por %p38, %p39
      %p41 = scmp.ne.s32.totalorder %s30, %s31
      %p42 = scmp.eq.s32.totalorder %s22, 0
      %p43 = por %p41, %p42
      %p44 = scmp.ne.s32.totalorder %s30, %s31
      %p45 = scmp.eq.s32.totalorder %s23, 1
      %p46 = por %p44, %p45
      %p48 = scmp.ne.s32.totalorder %s31, %s47
      %p49 = scmp.eq.s32.totalorder %s23, 0
      %p50 = por %p48, %p49
      %s52 = sadd.s32 %s51, 1
      %p55 = scmp.eq.s32.totalorder %s17, 1
      %p56 = scmp.ne.s32.totalorder %s51, %s53
      %p57 = scmp.eq.s32.totalorder %s17, 0
      %p58 = por %p56, %p57
      %p59 = scmp.ne.s32.totalorder %s51, %s53
      %p60 = scmp.eq.s32.totalorder %s22, 1
      %p61 = por %p59, %p60
      %p62 = scmp.ne.s32.totalorder %s53, %s54
      %p63 = scmp.eq.s32.totalorder %s22, 0
      %p64 = por %p62, %p63
      %p65 = scmp.ne.s32.totalorder %s53, %s54
      %p66 = scmp.eq.s32.totalorder %s23, 1
      %p67 = por %p65, %p66
      %p69 = scmp.ne.s32.totalorder %s54, %s68
      %p70 = scmp.eq.s32.totalorder %s23, 0
      %p71 = por %p69, %p70
      %s73 = sadd.s32 %s72, 1
      %p76 = scmp.eq.s32.totalorder %s17, 1
      %p77 = scmp.ne.s32.totalorder %s72, %s74
      %p78 = scmp.eq.s32.totalorder %s17, 0
      %p79 = por %p77, %p78
      %p80 = scmp.ne.s32.totalorder %s72, %s74
      %p81 = scmp.eq.s32.totalorder %s22, 1
      %p82 = por %p80, %p81
      %p83 = scmp.ne.s32.totalorder %s74, %s75
      %p84 = scmp.eq.s32.totalorder %s22, 0
      %p85 = por %p83, %p84
      %p86 = scmp.ne.s32.totalorder %s74, %s75
      %p87 = scmp.eq.s32.totalorder %s23, 1
      %p88 = por %p86, %p87
      %p90 = scmp.ne.s32.totalorder %s75, %s89
      %p91 = scmp.eq.s32.totalorder %s23, 0
      %p92 = por %p90, %p91
      %s94 = sadd.s32 %s93, 1
      %p97 = scmp.eq.s32.totalorder %s17, 1
      %p98 = scmp.ne.s32.totalorder %s93, %s95
      %p99 = scmp.eq.s32.totalorder %s17, 0
      %p100 = por %p98, %p99
      %p101 = scmp.ne.s32.totalorder %s93, %s95
      %p102 = scmp.eq.s32.totalorder %s22, 1
      %p103 = por %p101, %p102
      %p104 = scmp.ne.s32.totalorder %s95, %s96
      %p105 = scmp.eq.s32.totalorder %s22, 0
      %p106 = por %p104, %p105
      %p107 = scmp.ne.s32.totalorder %s95, %s96
      %p108 = scmp.eq.s32.totalorder %s23, 1
      %p109 = por %p107, %p108
      %p111 = scmp.ne.s32.totalorder %s96, %s110
      %p112 = scmp.eq.s32.totalorder %s23, 0
      %p113 = por %p111, %p112
      %s114 = ssub.s32 %s17, %s24
      %p115 = scmp.eq.s32.totalorder %s114, 0
      %s117 = sadd.s32 %s116, 1
      %s118 = scalar_select %p115, %s116, %s117
      %p121 = pneg %p115
      %p122 = scmp.eq.s32.totalorder %s17, 1
      %p123 = por %p121, %p122
      %p124 = scmp.ne.s32.totalorder %s116, %s119
      %p125 = scmp.eq.s32.totalorder %s17, 0
      %p126 = por %p124, %p125
      %p127 = scmp.ne.s32.totalorder %s116, %s119
      %p128 = scmp.eq.s32.totalorder %s22, 1
      %p129 = por %p127, %p128
      %p130 = scmp.ne.s32.totalorder %s119, %s120
      %p131 = scmp.eq.s32.totalorder %s22, 0
      %p132 = por %p130, %p131
      %p133 = scmp.ne.s32.totalorder %s119, %s120
      %p134 = scmp.eq.s32.totalorder %s23, 1
      %p135 = por %p133, %p134
      %p137 = scmp.ne.s32.totalorder %s120, %s136
      %p138 = scmp.eq.s32.totalorder %s23, 0
      %p139 = por %p137, %p138
      %p140 = scmp.le.s32.totalorder 1, %s17
      %p141 = scmp.lt.s32.totalorder %s17, 3
      %p142 = pnand %p140, %p141
      %p143 = pneg %p142
      // Predicated region
      $region9: #{tpu_custom_call.1} parent=5 // pred_check
        _
      $region10: #{tpu_custom_call.1} parent=5 // pred_check_branch
        %145 = sbr.rel (%p142) target = $region12
      $region11: #{tpu_custom_call.1} parent=5 // pred_region
        %s146 = ssub.s32 %s17, 1
        // Predicated region
        $region13: #{tpu_custom_call.1} parent=11 // pred_check
          %p147 = pneg %p64
        $region14: #{tpu_custom_call.1} parent=11 // pred_check_branch
          %149 = sbr.rel (%p147) target = $region16
        $region15: #{tpu_custom_call.1} parent=11 // pred_region
          %s151 = ssub.s32 128, 128
          %152 = vsyncadd [#allocation6], %s151
          %s153 = sshll.u32 [#allocation5], 4
          %s154 = int_to_ptr.vmem [resolvable:$true] %s153
          %159 = dma.hbm_to_vmem [thread:$0]  %s1, 128, %s154, [#allocation6], 64, 64, 4
        $region16: #{tpu_custom_call.1} parent=11 // pred_fallthru
          _
        // Predicated region
        $region17: #{tpu_custom_call.1} parent=11 // pred_check
          %p160 = pneg %p85
        $region18: #{tpu_custom_call.1} parent=11 // pred_check_branch
          %162 = sbr.rel (%p160) target = $region20
        $region19: #{tpu_custom_call.1} parent=11 // pred_region
          %s164 = ssub.s32 1024, 1024
          %165 = vsyncadd [#allocation6], %s164
          %s166 = sshll.u32 [#allocation7], 4
          %s167 = int_to_ptr.vmem [resolvable:$true] %s166
          %172 = dma.hbm_to_vmem [thread:$0]  %s2, 1024, %s167, [#allocation6], 64, 64, 4
        $region20: #{tpu_custom_call.1} parent=11 // pred_fallthru
          _
        // Predicated region
        $region21: #{tpu_custom_call.1} parent=11 // pred_check
          %p173 = pneg %p106
        $region22: #{tpu_custom_call.1} parent=11 // pred_check_branch
          %175 = sbr.rel (%p173) target = $region24
        $region23: #{tpu_custom_call.1} parent=11 // pred_region
          _
        $region24: #{tpu_custom_call.1} parent=11 // pred_fallthru
          _
      $region12: #{tpu_custom_call.1} parent=5 // pred_fallthru
        _
      %p176 = scmp.lt.s32.totalorder %s17, 2
      // Predicated region
      $region25: #{tpu_custom_call.1} parent=5 // pred_check
        %p177 = pneg %p176
      $region26: #{tpu_custom_call.1} parent=5 // pred_check_branch
        %179 = sbr.rel (%p177) target = $region28
      $region27: #{tpu_custom_call.1} parent=5 // pred_region
        // Predicated region
        $region29: #{tpu_custom_call.1} parent=27 // pred_check
          %p180 = pneg %p37
        $region30: #{tpu_custom_call.1} parent=27 // pred_check_branch
          %182 = sbr.rel (%p180) target = $region32
        $region31: #{tpu_custom_call.1} parent=27 // pred_region
          %s183 = sand.u32 %s27, 1
          %s184 = scalar_lea.sflag [#allocation3], %s183
          %s185 = sand.u32 %s27, 1
          %s186 = smul.addr %s185, 8
          %s187 = scalar_lea.vmem [#allocation2], %s186
          %s189 = ssub.s32 128, 128
          %190 = vsyncadd %s184, %s189
          %s191 = smul.addr %s17, 128
          %s192 = scalar_lea.hbm %s0, %s191
          %s194 = sshll.u32 %s187, 4
          %s195 = int_to_ptr.vmem [resolvable:$true] %s194
          %197 = dma.hbm_to_vmem [thread:$0]  %s192, 128, %s195, %s184
        $region32: #{tpu_custom_call.1} parent=27 // pred_fallthru
          _
      $region28: #{tpu_custom_call.1} parent=5 // pred_fallthru
        _
      %p198 = scmp.le.s32.totalorder 1, %s17
      %p199 = scmp.lt.s32.totalorder %s17, 3
      %p200 = pnand %p198, %p199
      %p201 = pneg %p200
      // Predicated region
      $region33: #{tpu_custom_call.1} parent=5 // pred_check
        _
      $region34: #{tpu_custom_call.1} parent=5 // pred_check_branch
        %203 = sbr.rel (%p200) target = $region36
      $region35: #{tpu_custom_call.1} parent=5 // pred_region
        %s204 = ssub.s32 %s17, 1
        %s205 = sand.u32 %s30, 1
        %s206 = scalar_lea.sflag [#allocation3], %s205
        %s207 = sand.u32 %s30, 1
        %s208 = smul.addr %s207, 8
        %s209 = scalar_lea.vmem [#allocation2], %s208
        // Predicated region
        $region37: #{tpu_custom_call.1} parent=35 // pred_check
          %p210 = pneg %p43
        $region38: #{tpu_custom_call.1} parent=35 // pred_check_branch
          %212 = sbr.rel (%p210) target = $region40
        $region39: #{tpu_custom_call.1} parent=35 // pred_region
          %213 = dma.done %s206, 128
        $region40: #{tpu_custom_call.1} parent=35 // pred_fallthru
          _
        // Predicated region
        $region41: #{tpu_custom_call.1} parent=35 // pred_check
          %p214 = pneg %p64
        $region42: #{tpu_custom_call.1} parent=35 // pred_check_branch
          %216 = sbr.rel (%p214) target = $region44
        $region43: #{tpu_custom_call.1} parent=35 // pred_region
          %217 = dma.done [#allocation6], 128
        $region44: #{tpu_custom_call.1} parent=35 // pred_fallthru
          _
        // Predicated region
        $region45: #{tpu_custom_call.1} parent=35 // pred_check
          %p218 = pneg %p85
        $region46: #{tpu_custom_call.1} parent=35 // pred_check_branch
          %220 = sbr.rel (%p218) target = $region48
        $region47: #{tpu_custom_call.1} parent=35 // pred_region
          %221 = dma.done [#allocation6], 1024
        $region48: #{tpu_custom_call.1} parent=35 // pred_fallthru
          _
        %s222 = sand.u32 %s30, 1
        %s223 = scalar_lea.sflag [#allocation3], %s222
        %s224 = sand.u32 %s30, 1
        %s225 = smul.addr %s224, 8
        %s226 = scalar_lea.vmem [#allocation2], %s225
        %p227 = pneg %p43
        %p228 = pneg %p40
        %p229 = pneg %p64
        %p230 = pneg %p61
        %p231 = pneg %p85
        %p232 = pneg %p82
        %p233 = pneg %p106
        %p234 = pneg %p103
        %p235 = pneg %p132
        %p236 = pneg %p129
        %s237 = sand.u32 %s119, 1
        %s238 = scalar_lea.sflag [#allocation4], %s237
        %s239 = sand.u32 %s119, 1
        %s240 = smul.addr %s239, 8
        %s241 = scalar_lea.vmem [#allocation8], %s240
        %v243 = vlaneseq
        %v244 = vand.u32 %v243, 127
        %vm245 = vcmp.lt.s32.totalorder %v244, 32
        %v246 = vsel %vm245, 1, 0
        %v247 = vcvt.s32.f32 %v246
        %v248 = vld [vmem:[%s3] sm:$0x3f]
        %v249 = vld [vmem:[%s209] sm:$0xff]
        %v250 = vpack.c.bf16 %v249, %v249
        %v251 = vld [vmem:[#allocation5] sm:$0xf]
        %v252 = vld [vmem:[#allocation5 + $0x4] sm:$0xf]
        %v253 = vlaneseq
        %v254 = vshrl.u32 %v253, 7
        %v255 = vsub.s32 0, %v254
        %v256 = vrot.slane %v248, %v255
        %v259 = vunpack.c.l.b16 %v251
        %v260 = vunpack.c.l.b16 %v252
        %v261 = vpack.c.b16 %v260, %v259
        %vm263 = vcmask 130048
        %v265 = vsel %vm263, %v250, 0
        %267 = vmatprep.subr.bf16.mxu0 0
        %268 = vmatpush1.bf16.msra.mxu0 %v261
        %269 = vmatprep.subr.bf16.mxu0 0
        %270 = vmatpush1.bf16.msra.mxu0 0
        %271 = vmatprep.subr.bf16.mxu0 0
        %272 = vmatpush1.bf16.msra.mxu0 0
        %273 = vmatprep.subr.bf16.mxu0 0
        %274 = vmatpush1.bf16.msra.mxu0 0
        %275 = vmatprep.subr.bf16.mxu0 0
        %276 = vmatpush1.bf16.msra.mxu0 0
        %277 = vmatprep.subr.bf16.mxu0 0
        %278 = vmatpush1.bf16.msra.mxu0 0
        %279 = vmatprep.subr.bf16.mxu0 0
        %280 = vmatpush1.bf16.msra.mxu0 0
        %281 = vmatprep.subr.bf16.mxu0 0
        %282 = vmatpush1.bf16.msra.mxu0 0
        %283 = vmatprep.subr.bf16.mxu0 0
        %284 = vmatpush1.bf16.msra.mxu0 0
        %285 = vmatprep.subr.bf16.mxu0 0
        %286 = vmatpush1.bf16.msra.mxu0 0
        %287 = vmatprep.subr.bf16.mxu0 0
        %288 = vmatpush1.bf16.msra.mxu0 0
        %289 = vmatprep.subr.bf16.mxu0 0
        %290 = vmatpush1.bf16.msra.mxu0 0
        %291 = vmatprep.subr.bf16.mxu0 0
        %292 = vmatpush1.bf16.msra.mxu0 0
        %293 = vmatprep.subr.bf16.mxu0 0
        %294 = vmatpush1.bf16.msra.mxu0 0
        %295 = vmatprep.subr.bf16.mxu0 0
        %296 = vmatpush1.bf16.msra.mxu0 0
        %297 = vmatprep.subr.bf16.mxu0 0
        %298 = vmatpush1.bf16.msra.mxu0 0
        %299 = vmatprep.mubr.bf16.mxu0 0
        %300 = vmatmul.mubr.bf16.gmra.mrb[0].mxu0 %v265
        %v301 = vpop.f32.mrb[0].mxu0
        %v302 = vadd.f32 %v256, %v301
        %v303 = vpop.f32.mrb[0].mxu0
        %v304 = vpop.f32.mrb[0].mxu0
        %v305 = vpop.f32.mrb[0].mxu0
        %306 = vdwg.mxu0
        %307 = vadd.xlane.f32.xlu0 %v302
        %v308 = vpop.xlane.xlu0 %307
        %v309 = vmul.f32 %v308, 0.03125
        %v310 = vsub.f32 %v302, %v309
        %v311 = vmul.f32 %v310, %v247
        %v312 = vmul.f32 %v311, %v311
        %313 = vadd.xlane.f32.xlu0 %v312
        %v314 = vpop.xlane.xlu0 %313
        %v315 = vmul.f32 %v314, 0.03125
        %v316 = vadd.f32 %v315, 1e-05
        %v317 = vrsqrt.pop %v316
        %v318 = vmul.f32 %v311, %v317
        %v319 = vlaneseq
        %v320 = vshrl.u32 %v319, 7
        %v321 = vsub.s32 1, %v320
        %v322 = vrot.slane %v248, %v321
        %v323 = vmul.f32 %v318, %v322
        %v324 = vlaneseq
        %v325 = vshrl.u32 %v324, 7
        %v326 = vsub.s32 2, %v325
        %v327 = vrot.slane %v248, %v326
        %v328 = vadd.f32 %v323, %v327
        %v329 = vmax.f32 %v328, 0.0
        %v330 = vpack.c.bf16 %v329, %v329
        %v331 = vld [vmem:[#allocation7] sm:$0xf]
        %v332 = vld [vmem:[#allocation7 + $0x4] sm:$0xf]
        %v333 = vld [vmem:[#allocation7 + $0x8] sm:$0xf]
        %v334 = vld [vmem:[#allocation7 + $0xc] sm:$0xf]
        %v335 = vld [vmem:[#allocation7 + $0x10] sm:$0xf]
        %v336 = vld [vmem:[#allocation7 + $0x14] sm:$0xf]
        %v337 = vld [vmem:[#allocation7 + $0x18] sm:$0xf]
        %v338 = vld [vmem:[#allocation7 + $0x1c] sm:$0xf]
        %v339 = vld [vmem:[#allocation7 + $0x20] sm:$0xf]
        %v340 = vld [vmem:[#allocation7 + $0x24] sm:$0xf]
        %v341 = vld [vmem:[#allocation7 + $0x28] sm:$0xf]
        %v342 = vld [vmem:[#allocation7 + $0x2c] sm:$0xf]
        %v343 = vld [vmem:[#allocation7 + $0x30] sm:$0xf]
        %v344 = vld [vmem:[#allocation7 + $0x34] sm:$0xf]
        %v345 = vld [vmem:[#allocation7 + $0x38] sm:$0xf]
        %v346 = vld [vmem:[#allocation7 + $0x3c] sm:$0xf]
        %v347 = vlaneseq
        %v348 = vshrl.u32 %v347, 7
        %v349 = vsub.s32 3, %v348
        %v350 = vrot.slane %v248, %v349
        %v367 = vunpack.c.l.b16 %v331
        %v368 = vunpack.c.l.b16 %v332
        %v369 = vunpack.c.l.b16 %v333
        %v370 = vunpack.c.l.b16 %v334
        %v371 = vunpack.c.l.b16 %v335
        %v372 = vunpack.c.l.b16 %v336
        %v373 = vunpack.c.l.b16 %v337
        %v374 = vunpack.c.l.b16 %v338
        %v375 = vunpack.c.l.b16 %v339
        %v376 = vunpack.c.l.b16 %v340
        %v377 = vunpack.c.l.b16 %v341
        %v378 = vunpack.c.l.b16 %v342
        %v379 = vunpack.c.l.b16 %v343
        %v380 = vunpack.c.l.b16 %v344
        %v381 = vunpack.c.l.b16 %v345
        %v382 = vunpack.c.l.b16 %v346
        %v383 = vpack.c.b16 %v368, %v367
        %v384 = vpack.c.b16 %v370, %v369
        %v385 = vpack.c.b16 %v372, %v371
        %v386 = vpack.c.b16 %v374, %v373
        %v387 = vpack.c.b16 %v376, %v375
        %v388 = vpack.c.b16 %v378, %v377
        %v389 = vpack.c.b16 %v380, %v379
        %v390 = vpack.c.b16 %v382, %v381
        %399 = vmatprep.subr.bf16.mxu0 0
        %400 = vmatpush1.bf16.msra.mxu0 %v383
        %401 = vmatprep.subr.bf16.mxu0 0
        %402 = vmatpush1.bf16.msra.mxu0 %v384
        %403 = vmatprep.subr.bf16.mxu0 0
        %404 = vmatpush1.bf16.msra.mxu0 %v385
        %405 = vmatprep.subr.bf16.mxu0 0
        %406 = vmatpush1.bf16.msra.mxu0 %v386
        %407 = vmatprep.subr.bf16.mxu0 0
        %408 = vmatpush1.bf16.msra.mxu0 %v387
        %409 = vmatprep.subr.bf16.mxu0 0
        %410 = vmatpush1.bf16.msra.mxu0 %v388
        %411 = vmatprep.subr.bf16.mxu0 0
        %412 = vmatpush1.bf16.msra.mxu0 %v389
        %413 = vmatprep.subr.bf16.mxu0 0
        %414 = vmatpush1.bf16.msra.mxu0 %v390
        %415 = vmatprep.subr.bf16.mxu0 0
        %416 = vmatpush1.bf16.msra.mxu0 0
        %417 = vmatprep.subr.bf16.mxu0 0
        %418 = vmatpush1.bf16.msra.mxu0 0
        %419 = vmatprep.subr.bf16.mxu0 0
        %420 = vmatpush1.bf16.msra.mxu0 0
        %421 = vmatprep.subr.bf16.mxu0 0
        %422 = vmatpush1.bf16.msra.mxu0 0
        %423 = vmatprep.subr.bf16.mxu0 0
        %424 = vmatpush1.bf16.msra.mxu0 0
        %425 = vmatprep.subr.bf16.mxu0 0
        %426 = vmatpush1.bf16.msra.mxu0 0
        %427 = vmatprep.subr.bf16.mxu0 0
        %428 = vmatpush1.bf16.msra.mxu0 0
        %429 = vmatprep.subr.bf16.mxu0 0
        %430 = vmatpush1.bf16.msra.mxu0 0
        %431 = vmatprep.mubr.bf16.mxu0 0
        %432 = vmatmul.mubr.bf16.gmra.mrb[0].mxu0 %v330
        %v433 = vpop.f32.mrb[0].mxu0
        %v434 = vadd.f32 %v350, %v433
        %v435 = vpop.f32.mrb[0].mxu0
        %v436 = vpop.f32.mrb[0].mxu0
        %v437 = vpop.f32.mrb[0].mxu0
        %438 = vdwg.mxu0
        %439 = vadd.xlane.f32.xlu0 %v434
        %v440 = vpop.xlane.xlu0 %439
        %v441 = vmul.f32 %v440, 0.03125
        %v442 = vsub.f32 %v434, %v441
        %v443 = vmul.f32 %v442, %v247
        %v444 = vmul.f32 %v443, %v443
        %445 = vadd.xlane.f32.xlu0 %v444
        %v446 = vpop.xlane.xlu0 %445
        %v447 = vmul.f32 %v446, 0.03125
        %v448 = vadd.f32 %v447, 1e-05
        %v449 = vrsqrt.pop %v448
        %v450 = vmul.f32 %v443, %v449
        %v451 = vlaneseq
        %v452 = vshrl.u32 %v451, 7
        %v453 = vsub.s32 4, %v452
        %v454 = vrot.slane %v248, %v453
        %v455 = vmul.f32 %v450, %v454
        %v456 = vlaneseq
        %v457 = vshrl.u32 %v456, 7
        %v458 = vsub.s32 5, %v457
        %v459 = vrot.slane %v248, %v458
        %v460 = vadd.f32 %v455, %v459
        %v461 = vmax.f32 %v460, 0.0
        %462 = vst [vmem:[%s241] sm:$0xff] %v461
        %s463 = sand.u32 %s119, 1
        %s464 = scalar_lea.sflag [#allocation4], %s463
        %s465 = sand.u32 %s119, 1
        %s466 = smul.addr %s465, 8
        %s467 = scalar_lea.vmem [#allocation8], %s466
        // Predicated region
        $region49: #{tpu_custom_call.1} parent=35 // pred_check
          %p468 = pneg %p129
        $region50: #{tpu_custom_call.1} parent=35 // pred_check_branch
          %470 = sbr.rel (%p468) target = $region52
        $region51: #{tpu_custom_call.1} parent=35 // pred_region
          %s472 = ssub.s32 128, 128
          %473 = vsyncadd %s464, %s472
          %s474 = smul.addr %s22, 128
          %s475 = scalar_lea.hbm %s4, %s474
          %s477 = sshll.u32 %s467, 4
          %s478 = int_to_ptr.vmem [resolvable:$true] %s477
          %480 = dma.vmem_to_hbm [thread:$0]  %s478, 128, %s475, %s464
        $region52: #{tpu_custom_call.1} parent=35 // pred_fallthru
          _
      $region36: #{tpu_custom_call.1} parent=5 // pred_fallthru
        _
      %p481 = scmp.le.s32.totalorder 2, %s17
      // Predicated region
      $region53: #{tpu_custom_call.1} parent=5 // pred_check
        %p482 = pneg %p481
      $region54: #{tpu_custom_call.1} parent=5 // pred_check_branch
        %484 = sbr.rel (%p482) target = $region56
      $region55: #{tpu_custom_call.1} parent=5 // pred_region
        %s485 = ssub.s32 %s17, 2
        // Predicated region
        $region57: #{tpu_custom_call.1} parent=55 // pred_check
          %p486 = pneg %p135
        $region58: #{tpu_custom_call.1} parent=55 // pred_check_branch
          %488 = sbr.rel (%p486) target = $region60
        $region59: #{tpu_custom_call.1} parent=55 // pred_region
          %s489 = sand.u32 %s120, 1
          %s490 = scalar_lea.sflag [#allocation4], %s489
          %s491 = sand.u32 %s120, 1
          %s492 = smul.addr %s491, 8
          %s493 = scalar_lea.vmem [#allocation8], %s492
          %494 = dma.done %s490, 128
        $region60: #{tpu_custom_call.1} parent=55 // pred_fallthru
          _
      $region56: #{tpu_custom_call.1} parent=5 // pred_fallthru
        _
    $region6: #{tpu_custom_call.1} parent=1 // loop_footer
      %s21 = sadd.s32 1, %s17
    $region7: #{tpu_custom_call.1} parent=1 // loop_footer_branch
      %16 = sbr.rel target = $region3
    $region8: #{tpu_custom_call.1} parent=1 // loop_exit
      _
    %495 = vsyncpa [#allocation3], 1
    %s496 = scalar_lea.sflag [#allocation3], 1
    %497 = vsyncpa %s496, 1
    %498 = vsyncpa [#allocation6], 1
    %499 = vsyncpa [#allocation4], 1
    %s500 = scalar_lea.sflag [#allocation4], 1
    %501 = vsyncpa %s500, 1

</llo_original>
